<compile_context>
chip_gen: v6e
topology: v6e:2x2x1
jax: 0.10.0
libtpu: 0.0.40
codegen_flags: <defaults>
</compile_context>

<pallas_src>
import functools

import jax
import jax.numpy as jnp
import numpy as np
from jax.experimental import pallas as pl
from jax.experimental.pallas import tpu as pltpu


# ----------------------------- helpers ---------------------------------------
def _round_up(x, m):
    return (x + m - 1) // m * m


def _vmem_budget_bytes():
    """~85% of this generation's per-core VMEM (64 MiB v7x, 128 MiB v5e/v6e)."""
    cap = None
    try:
        cap = getattr(pltpu.get_tpu_info(), "vmem_capacity_bytes", None)
    except Exception:
        cap = None
    if not cap:
        cap = 64 * 2 ** 20  # conservative fallback (v7x per-core size)
    return int(cap * 0.85)


# ----------------------------- kernels ----------------------------------------
def _input_proj_kernel(x_ref, w_ref, b_ref, g_ref):
    """One (tm, tn) tile of the hoisted input projection x @ [W_ih_f | W_ih_b] + b.

    x_ref : (tm, E)   rows of the flattened (T_pad*Bp, E) input (compute dtype)
    w_ref : (E, tn)   column block of the concatenated input weights (compute dtype)
    b_ref : (1, tn)   column block of the concatenated biases (f32)
    g_ref : (tm, tn)  gate pre-activations, stored in the compute dtype
    """
    g = jnp.dot(x_ref[...], w_ref[...], preferred_element_type=jnp.float32) + b_ref[...]
    g_ref[...] = g.astype(g_ref.dtype)


def _bilstm_recurrence_kernel(len_ref, gxf_ref, gxb_ref, whh_f_ref, whh_b_ref,
                              out_ref,
                              hf, cf, hb, cb, mpf, mpb,
                              *, Hp, Bp, TC, T_pad, pool_type):
    """One chunk of TC timesteps of the fused forward+backward recurrence.

    len_ref   : (Bp, 1)          resident int32 lengths (constant index_map)
    gxf_ref   : (TC*Bp, 4*Hp)    streamed fwd gate pre-activations for chunk ci
    gxb_ref   : (TC*Bp, 4*Hp)    streamed bwd gate pre-activations (chunk nchunks-1-ci)
    whh_*_ref : (Hp, 4*Hp)       resident hidden->gates weights (compute dtype)
    out_ref   : (Bp, 2*Hp)       resident pooled output, written at the last chunk
    hf..mpb   : (Bp, Hp) f32     recurrent state / max-pool scratch
    """
    ci = pl.program_id(0)
    nchunks = pl.num_programs(0)

    @pl.when(ci == 0)
    def _():
        hf[...] = jnp.zeros_like(hf)
        cf[...] = jnp.zeros_like(cf)
        hb[...] = jnp.zeros_like(hb)
        cb[...] = jnp.zeros_like(cb)
        mpf[...] = jnp.full_like(mpf, -jnp.inf)
        mpb[...] = jnp.full_like(mpb, -jnp.inf)

    cdt = whh_f_ref.dtype              # matmul input dtype (bf16 default)
    lens = len_ref[...]                # (Bp, 1) int32, resident

    hf_v, cf_v = hf[...], cf[...]
    cb_v, hb_v = cb[...], hb[...]
    mpf_v, mpb_v = mpf[...], mpb[...]

    def update(gates, valid, h, c_, mp):
        i = jax.nn.sigmoid(gates[:, 0 * Hp:1 * Hp])
        f = jax.nn.sigmoid(gates[:, 1 * Hp:2 * Hp])
        g = jnp.tanh(gates[:, 2 * Hp:3 * Hp])
        o = jax.nn.sigmoid(gates[:, 3 * Hp:4 * Hp])
        c_new = f * c_ + i * g
        h_new = o * jnp.tanh(c_new)
        # packed-sequence semantics: freeze state at padded timesteps
        h_out = jnp.where(valid, h_new, h)
        c_out = jnp.where(valid, c_new, c_)
        if pool_type == "max":
            mp = jnp.where(valid, jnp.maximum(mp, h_new), mp)
        return h_out, c_out, mp

    # Statically unrolled chunk: amortizes grid-step overhead, interleaves the two
    # independent hidden matmuls (fwd/bwd) with the previous step's EUP/VPU work.
    for j in range(TC):
        t_f = ci * TC + j              # forward global timestep
        t_b = T_pad - 1 - t_f          # backward global timestep

        gf = gxf_ref[j * Bp:(j + 1) * Bp, :].astype(jnp.float32)
        gb = gxb_ref[(TC - 1 - j) * Bp:(TC - j) * Bp, :].astype(jnp.float32)

        gates_f = gf + jnp.dot(hf_v.astype(cdt), whh_f_ref[...],
                               preferred_element_type=jnp.float32)
        gates_b = gb + jnp.dot(hb_v.astype(cdt), whh_b_ref[...],
                               preferred_element_type=jnp.float32)

        valid_f = t_f < lens           # (Bp, 1), broadcasts over lanes
        valid_b = t_b < lens
        hf_v, cf_v, mpf_v = update(gates_f, valid_f, hf_v, cf_v, mpf_v)
        hb_v, cb_v, mpb_v = update(gates_b, valid_b, hb_v, cb_v, mpb_v)

    hf[...], cf[...] = hf_v, cf_v
    hb[...], cb[...] = hb_v, cb_v
    if pool_type == "max":
        mpf[...], mpb[...] = mpf_v, mpb_v

    @pl.when(ci == nchunks - 1)
    def _():
        if pool_type == "max":
            out_ref[:, :Hp] = mpf_v
            out_ref[:, Hp:] = mpb_v
        else:  # 'last' -> concat(h_n_fwd, h_n_bwd) of the packed LSTM
            out_ref[:, :Hp] = hf_v
            out_ref[:, Hp:] = hb_v


# ----------------------------- wrapper ----------------------------------------
def blstm_encoder(sent, lengths, params, pool_type="max",
                  compute_dtype=jnp.bfloat16, t_chunk=4):
    """sent: (T, B, E) f32, lengths: (B,) int32 -> (B, 2H) f32."""
    T, B, E = sent.shape
    H = params["whh_f"].shape[0]

    # ---- padding: batch to a sublane multiple, each gate block to a lane multiple,
    #      time to a multiple of the chunk size (extra steps are masked out)
    Bp = _round_up(max(B, 8), 8)
    Hp = _round_up(H, 128)
    TC = max(1, min(int(t_chunk), 8))
    T_pad = _round_up(T, TC)
    nchunks = T_pad // TC

    budget = _vmem_budget_bytes()
    cdt_size = jnp.dtype(compute_dtype).itemsize

    sent_p = jnp.pad(sent, ((0, T_pad - T), (0, Bp - B), (0, 0)))
    len_p = jnp.pad(lengths.astype(jnp.int32), (0, Bp - B), constant_values=1)
    len_p = len_p[:, None]                                          # (Bp, 1)

    def pad_gate_cols(w):  # (..., 4H) -> (..., 4Hp): pad each of the 4 gate blocks
        parts = jnp.split(w, 4, axis=-1)
        parts = [jnp.pad(p, [(0, 0)] * (w.ndim - 1) + [(0, Hp - H)]) for p in parts]
        return jnp.concatenate(parts, axis=-1)

    def pad_hidden(w):     # (H, 4H) -> (Hp, 4Hp)
        return jnp.pad(pad_gate_cols(w), ((0, Hp - H), (0, 0)))

    wih_f = pad_gate_cols(params["wih_f"]).astype(compute_dtype)    # (E, 4Hp)
    wih_b = pad_gate_cols(params["wih_b"]).astype(compute_dtype)
    whh_f = pad_hidden(params["whh_f"]).astype(compute_dtype)       # (Hp, 4Hp)
    whh_b = pad_hidden(params["whh_b"]).astype(compute_dtype)
    b_f = pad_gate_cols(params["b_f"]).astype(jnp.float32)          # (1, 4Hp)
    b_b = pad_gate_cols(params["b_b"]).astype(jnp.float32)

    w_cat = jnp.concatenate([wih_f, wih_b], axis=-1)                # (E, 8Hp)
    b_cat = jnp.concatenate([b_f, b_b], axis=-1)                    # (1, 8Hp)

    # ---- 1) hoisted input projection: tiled over rows and output columns ----
    NC = 8 * Hp                                                     # always a 1024-multiple
    tn = 2048 if (NC % 2048 == 0 and NC >= 2048) else min(NC, 1024)
    rows = T_pad * Bp
    tm = 512 if rows >= 512 else rows                               # fixed tile; pad rows, no divisor search

    def _proj_bytes(tm_):   # rough double-buffered working set of one grid step
        return (2 * tm_ * E * cdt_size        # x block
                + 2 * E * tn * cdt_size       # weight column block
                + 2 * tn * 4                  # bias block
                + 2 * tm_ * tn * cdt_size)    # gx output block

    while tm > 64 and _proj_bytes(tm) > budget // 2:
        tm = _round_up(tm // 2, 8)
    rows_p = _round_up(rows, tm)

    x2d = sent_p.astype(compute_dtype).reshape(rows, E)
    x2d = jnp.pad(x2d, ((0, rows_p - rows), (0, 0)))
    proj_vmem = int(min(budget, max(2 * _proj_bytes(tm), 8 * 2 ** 20)))

    gx2d = pl.pallas_call(
        _input_proj_kernel,
        out_shape=jax.ShapeDtypeStruct((rows_p, NC), compute_dtype),   # gx stored in compute dtype
        grid=(rows_p // tm, NC // tn),
        in_specs=[pl.BlockSpec((tm, E), lambda i, j: (i, 0)),
                  pl.BlockSpec((E, tn), lambda i, j: (0, j)),
                  pl.BlockSpec((1, tn), lambda i, j: (0, j))],
        out_specs=pl.BlockSpec((tm, tn), lambda i, j: (i, j)),
        compiler_params=pltpu.CompilerParams(
            dimension_semantics=("parallel", "parallel"),
            vmem_limit_bytes=proj_vmem),
    )(x2d, w_cat, b_cat)

    # ---- 2) fused bidirectional recurrence, streamed over chunks of TC timesteps ----
    resident = (4 * Hp * 4 * Hp * cdt_size              # W_hh fwd+bwd (assume 2 buffers each)
                + 2 * 2 * TC * Bp * 4 * Hp * cdt_size   # double-buffered gx chunks, 2 dirs
                + Bp * 2 * Hp * 4                       # resident output block
                + 6 * Bp * Hp * 4                       # h/c/max-pool scratch
                + 2 * Bp * 4)                           # lengths
    rec_vmem = int(min(budget, max(resident + (4 << 20), 16 * 2 ** 20)))

    out = pl.pallas_call(
        functools.partial(_bilstm_recurrence_kernel, Hp=Hp, Bp=Bp, TC=TC,
                          T_pad=T_pad, pool_type=pool_type),
        out_shape=jax.ShapeDtypeStruct((Bp, 2 * Hp), jnp.float32),
        grid=(nchunks,),
        in_specs=[
            pl.BlockSpec((Bp, 1), lambda c: (0, 0)),                         # lengths (resident)
            pl.BlockSpec((TC * Bp, 4 * Hp), lambda c: (c, 0)),               # gx fwd chunk
            pl.BlockSpec((TC * Bp, 4 * Hp), lambda c: (nchunks - 1 - c, 1)), # gx bwd chunk (reversed)
            pl.BlockSpec((Hp, 4 * Hp), lambda c: (0, 0)),                    # W_hh fwd (resident)
            pl.BlockSpec((Hp, 4 * Hp), lambda c: (0, 0)),                    # W_hh bwd (resident)
        ],
        out_specs=pl.BlockSpec((Bp, 2 * Hp), lambda c: (0, 0)),
        scratch_shapes=[pltpu.VMEM((Bp, Hp), jnp.float32) for _ in range(6)],
        compiler_params=pltpu.CompilerParams(
            dimension_semantics=("arbitrary",),
            vmem_limit_bytes=rec_vmem),
    )(len_p, gx2d, gx2d, whh_f, whh_b)

    # strip batch / gate padding
    return jnp.concatenate([out[:B, :H], out[:B, Hp:Hp + H]], axis=-1)


# ----------------------------- pure-JAX reference ------------------------------
def blstm_reference(sent, lengths, p, pool_type="max", compute_dtype=jnp.float32):
    T, B, E = sent.shape
    H = p["whh_f"].shape[0]
    mask = (jnp.arange(T)[:, None] < lengths[None, :]).astype(jnp.float32)  # (T, B)
    x = sent.astype(compute_dtype)

    def run(wih, whh, b, xs, ms):
        wih = wih.astype(compute_dtype)
        whh = whh.astype(compute_dtype)
        gx = jnp.dot(xs.reshape(T * B, E), wih, preferred_element_type=jnp.float32)
        gx = gx.reshape(T, B, 4 * H) + b.astype(jnp.float32)

        def step(carry, inp):
            h, c, mp = carry
            g_x, m = inp
            gates = g_x + jnp.dot(h.astype(compute_dtype), whh,
                                  preferred_element_type=jnp.float32)
            i = jax.nn.sigmoid(gates[:, :H])
            f = jax.nn.sigmoid(gates[:, H:2 * H])
            g = jnp.tanh(gates[:, 2 * H:3 * H])
            o = jax.nn.sigmoid(gates[:, 3 * H:])
            c_new = f * c + i * g
            h_new = o * jnp.tanh(c_new)
            valid = m[:, None] > 0.0
            h = jnp.where(valid, h_new, h)
            c = jnp.where(valid, c_new, c)
            mp = jnp.where(valid, jnp.maximum(mp, h_new), mp)
            return (h, c, mp), None

        init = (jnp.zeros((B, H), jnp.float32), jnp.zeros((B, H), jnp.float32),
                jnp.full((B, H), -jnp.inf, jnp.float32))
        (h, _, mp), _ = jax.lax.scan(step, init, (gx, ms))
        return h, mp

    hf, mpf = run(p["wih_f"], p["whh_f"], p["b_f"], x, mask)
    hb, mpb = run(p["wih_b"], p["whh_b"], p["b_b"], x[::-1], mask[::-1])
    if pool_type == "max":
        return jnp.concatenate([mpf, mpb], axis=-1)
    return jnp.concatenate([hf, hb], axis=-1)


# ----------------------------- params -------------------------------------------
def make_params(key, E, H):
    """PyTorch-style LSTM init: U(-1/sqrt(H), 1/sqrt(H)); biases folded (b_ih + b_hh)."""
    k = 1.0 / np.sqrt(H)
    keys = jax.random.split(key, 8)
    u = lambda kk, shape: jax.random.uniform(kk, shape, jnp.float32, -k, k)
    return {
        "wih_f": u(keys[0], (E, 4 * H)),
        "whh_f": u(keys[1], (H, 4 * H)),
        "b_f":   u(keys[2], (1, 4 * H)) + u(keys[3], (1, 4 * H)),
        "wih_b": u(keys[4], (E, 4 * H)),
        "whh_b": u(keys[5], (H, 4 * H)),
        "b_b":   u(keys[6], (1, 4 * H)) + u(keys[7], (1, 4 * H)),
    }


# ----------------------------- main ----------------------------------------------
if __name__ == "__main__":
    T, B, E, H = 8, 2, 16, 32   # seq=8, batch=2, word_emb_dim=16, enc_lstm_dim=32

    key = jax.random.PRNGKey(0)
    k_x, k_p = jax.random.split(key)
    sent = jax.random.normal(k_x, (T, B, E), dtype=jnp.float32)
    lengths = jnp.array([8, 5], dtype=jnp.int32)
    params = make_params(k_p, E, H)

    # float32 weights: strict check against the pure-JAX reference
    for pool in ("max", "last"):
        out = jax.block_until_ready(
            blstm_encoder(sent, lengths, params, pool, jnp.float32))
        ref = blstm_reference(sent, lengths, params, pool, jnp.float32)
        np.testing.assert_allclose(np.asarray(out), np.asarray(ref),
                                   atol=2e-3, rtol=2e-3)
        assert out.shape == (B, 2 * H)

    # bfloat16 path (default / production: bf16 MXU matmuls, bf16 gx storage)
    for pool in ("max", "last"):
        out = jax.block_until_ready(
            blstm_encoder(sent, lengths, params, pool, jnp.bfloat16))
        ref = blstm_reference(sent, lengths, params, pool, jnp.bfloat16)
        np.testing.assert_allclose(np.asarray(out), np.asarray(ref),
                                   atol=3e-2, rtol=3e-2)
        assert out.shape == (B, 2 * H)

    print("KERNEL_OK")
</pallas_src>

<mosaic_0001>
module attributes {stable_mosaic.version = 11 : i64} {
  func.func @_input_proj_kernel(%arg0: i32, %arg1: i32, %arg2: memref<64x16xf32, #tpu.memory_space<vmem>>, %arg3: memref<16x1024xf32, #tpu.memory_space<vmem>>, %arg4: memref<1x1024xf32, #tpu.memory_space<vmem>>, %arg5: memref<64x1024xf32, #tpu.memory_space<vmem>>) attributes {dimension_semantics = [#tpu.dimension_semantics<parallel>, #tpu.dimension_semantics<parallel>], iteration_bounds = array<i64: 1, 1>, scalar_prefetch = 0 : i64, scratch_operands = 0 : i64, tpu.core_type = #tpu.core_type<tc>, window_params = [{transform_indices = @transform_0, window_bounds = array<i64: 64, 16>}, {transform_indices = @transform_1, window_bounds = array<i64: 16, 1024>}, {transform_indices = @transform_2, window_bounds = array<i64: 1, 1024>}, {transform_indices = @transform_3, window_bounds = array<i64: 64, 1024>}]} {
    %c0 = arith.constant 0 : index
    %c0_0 = arith.constant 0 : index
    %0 = vector.load %arg2[%c0, %c0_0] : memref<64x16xf32, #tpu.memory_space<vmem>>, vector<64x16xf32>
    %c0_1 = arith.constant 0 : index
    %c0_2 = arith.constant 0 : index
    %1 = vector.load %arg3[%c0_1, %c0_2] : memref<16x1024xf32, #tpu.memory_space<vmem>>, vector<16x1024xf32>
    %cst = arith.constant dense<0.000000e+00> : vector<64x1024xf32>
    %2 = tpu.matmul %0, %1, %cst {dimension_numbers = #tpu.dot_dimension_numbers<[1], [0], [0], [1], [0, 0, 1, 1], [], []>} : vector<64x16xf32>, vector<16x1024xf32>, vector<64x1024xf32> -> vector<64x1024xf32>
    %c0_3 = arith.constant 0 : index
    %c0_4 = arith.constant 0 : index
    %3 = vector.load %arg4[%c0_3, %c0_4] : memref<1x1024xf32, #tpu.memory_space<vmem>>, vector<1x1024xf32>
    %4 = vector.broadcast %3 : vector<1x1024xf32> to vector<64x1024xf32>
    %5 = arith.addf %2, %4 : vector<64x1024xf32>
    %c0_5 = arith.constant 0 : index
    %c0_6 = arith.constant 0 : index
    %6 = vector.load %arg5[%c0_5, %c0_6] : memref<64x1024xf32, #tpu.memory_space<vmem>>, vector<64x1024xf32>
    tpu.vector_store %arg5[%c0_5, %c0_6], %5 {strides = array<i32>} : memref<64x1024xf32, #tpu.memory_space<vmem>>, vector<64x1024xf32>,
    return
  }
  func.func @transform_0(%arg0: i32, %arg1: i32) -> (i32, i32) {
    %c0_i32 = arith.constant 0 : i32
    %c0_i32_0 = arith.constant 0 : i32
    return %arg0, %c0_i32 : i32, i32
  }
  func.func @transform_1(%arg0: i32, %arg1: i32) -> (i32, i32) {
    %c0_i32 = arith.constant 0 : i32
    %c0_i32_0 = arith.constant 0 : i32
    return %c0_i32, %arg1 : i32, i32
  }
  func.func @transform_2(%arg0: i32, %arg1: i32) -> (i32, i32) {
    %c0_i32 = arith.constant 0 : i32
    %c0_i32_0 = arith.constant 0 : i32
    return %c0_i32, %arg1 : i32, i32
  }
  func.func @transform_3(%arg0: i32, %arg1: i32) -> (i32, i32) {
    %c0_i32 = arith.constant 0 : i32
    return %arg0, %arg1 : i32, i32
  }
}

</mosaic_0001>

<llo_original>
// kernel: tpu_custom_call.1
$region0: #{tpu_custom_call.1}
  #allocation0 [shape = 'u32[]', space=smem, size = 0x4, offset = 0x4, fixed_abs, tag = 'smem constant byte address 0x4 - core index']
  #allocation1 [shape = 'u32[144,128]{1,0:T(1,128)}', space=vmem, size = 0x12000, scoped, tag = 'internal scratch']
  %s0 = inlined_call_operand.vmem [shape: f32[64,16], index: 0, kind: input, shape index: {}]
  %s1 = inlined_call_operand.hbm [shape: f32[16,1024], index: 1, kind: input, shape index: {}]
  %s2 = inlined_call_operand.vmem [shape: f32[1,1024], index: 2, kind: input, shape index: {}]
  %s3 = inlined_call_operand.hbm [shape: f32[64,1024], index: 3, kind: output, shape index: {}]
  %s4 = sld [smem:[#allocation0]]
  $region26: #{tpu_custom_call.1} parent=0
    _
  %s6 = ssub.s32 1, %s4
  %s7 = scalar_select 0, %s6, %s4
  $region1: #{tpu_custom_call.1} parent=0
    #allocation2 [shape = 'u8[65536]{0}', space=vmem, size = 0x10000, scoped, tag = 'input window, operand 1, single buffered']
    #allocation3 [shape = 's32[1]{0}', space=sflag, size = 0x4, scoped, tag = 'scoped memory for tpu_custom_call.1']
    #allocation4 [shape = 's32[1]{0}', space=sflag, size = 0x4, scoped, tag = 'scoped memory for tpu_custom_call.1']
    #allocation5 [shape = 'u8[262144]{0}', space=vmem, size = 0x40000, scoped, tag = 'output window, operand 0, single buffered']
    %8 = vsyncpa [#allocation3], 0
    %9 = vsyncpa [#allocation4], 0
    // Predicated region
    $region2: #{tpu_custom_call.1} parent=1 // pred_check
      _
    $region3: #{tpu_custom_call.1} parent=1 // pred_check_branch
      %11 = sbr.rel (0) target = $region5
    $region4: #{tpu_custom_call.1} parent=1 // pred_region
      _
    $region5: #{tpu_custom_call.1} parent=1 // pred_fallthru
      _
    // Predicated region
    $region6: #{tpu_custom_call.1} parent=1 // pred_check
      _
    $region7: #{tpu_custom_call.1} parent=1 // pred_check_branch
      %13 = sbr.rel (0) target = $region9
    $region8: #{tpu_custom_call.1} parent=1 // pred_region
      %s15 = ssub.s32 2048, 2048
      %16 = vsyncadd [#allocation3], %s15
      %s17 = sshll.u32 [#allocation2], 4
      %s18 = int_to_ptr.vmem [resolvable:$true] %s17
      %23 = dma.hbm_to_vmem [thread:$0]  %s1, 2048, %s18, [#allocation3], 1024, 1024, 64
    $region9: #{tpu_custom_call.1} parent=1 // pred_fallthru
      _
    // Predicated region
    $region10: #{tpu_custom_call.1} parent=1 // pred_check
      _
    $region11: #{tpu_custom_call.1} parent=1 // pred_check_branch
      %25 = sbr.rel (0) target = $region13
    $region12: #{tpu_custom_call.1} parent=1 // pred_region
      _
    $region13: #{tpu_custom_call.1} parent=1 // pred_fallthru
      _
    // Predicated region
    $region14: #{tpu_custom_call.1} parent=1 // pred_check
      _
    $region15: #{tpu_custom_call.1} parent=1 // pred_check_branch
      %27 = sbr.rel (0) target = $region17
    $region16: #{tpu_custom_call.1} parent=1 // pred_region
      %28 = dma.done [#allocation3], 2048
    $region17: #{tpu_custom_call.1} parent=1 // pred_fallthru
      _
    %v29 = vld [vmem:[%s0] sm:$0xff]
    %v30 = vld [vmem:[%s0 + $0x8] sm:$0xff]
    %v31 = vld [vmem:[%s0 + $0x10] sm:$0xff]
    %v32 = vld [vmem:[%s0 + $0x18] sm:$0xff]
    %v33 = vld [vmem:[%s0 + $0x20] sm:$0xff]
    %v34 = vld [vmem:[%s0 + $0x28] sm:$0xff]
    %v35 = vld [vmem:[%s0 + $0x30] sm:$0xff]
    %v36 = vld [vmem:[%s0 + $0x38] sm:$0xff]
    %v37 = vld [vmem:[#allocation2] sm:$0xff]
    %v38 = vld [vmem:[#allocation2 + $0x8] sm:$0xff]
    %v39 = vld [vmem:[#allocation2 + $0x10] sm:$0xff]
    %v40 = vld [vmem:[#allocation2 + $0x18] sm:$0xff]
    %v41 = vld [vmem:[#allocation2 + $0x20] sm:$0xff]
    %v42 = vld [vmem:[#allocation2 + $0x28] sm:$0xff]
    %v43 = vld [vmem:[#allocation2 + $0x30] sm:$0xff]
    %v44 = vld [vmem:[#allocation2 + $0x38] sm:$0xff]
    %v45 = vld [vmem:[#allocation2 + $0x40] sm:$0xff]
    %v46 = vld [vmem:[#allocation2 + $0x48] sm:$0xff]
    %v47 = vld [vmem:[#allocation2 + $0x50] sm:$0xff]
    %v48 = vld [vmem:[#allocation2 + $0x58] sm:$0xff]
    %v49 = vld [vmem:[#allocation2 + $0x60] sm:$0xff]
    %v50 = vld [vmem:[#allocation2 + $0x68] sm:$0xff]
    %v51 = vld [vmem:[#allocation2 + $0x70] sm:$0xff]
    %v52 = vld [vmem:[#allocation2 + $0x78] sm:$0xff]
    %v53 = vld [vmem:[%s2] sm:$0xff]
    %v55 = vlaneseq
    %v56 = vshrl.u32 %v55, 7
    %v57 = vsub.s32 0, %v56
    %v58 = vrot.slane %v53, %v57
    %v59 = vlaneseq
    %v60 = vshrl.u32 %v59, 7
    %v61 = vsub.s32 1, %v60
    %v62 = vrot.slane %v53, %v61
    %v63 = vlaneseq
    %v64 = vshrl.u32 %v63, 7
    %v65 = vsub.s32 2, %v64
    %v66 = vrot.slane %v53, %v65
    %v67 = vlaneseq
    %v68 = vshrl.u32 %v67, 7
    %v69 = vsub.s32 3, %v68
    %v70 = vrot.slane %v53, %v69
    %v71 = vlaneseq
    %v72 = vshrl.u32 %v71, 7
    %v73 = vsub.s32 4, %v72
    %v74 = vrot.slane %v53, %v73
    %v75 = vlaneseq
    %v76 = vshrl.u32 %v75, 7
    %v77 = vsub.s32 5, %v76
    %v78 = vrot.slane %v53, %v77
    %v79 = vlaneseq
    %v80 = vshrl.u32 %v79, 7
    %v81 = vsub.s32 6, %v80
    %v82 = vrot.slane %v53, %v81
    %v83 = vlaneseq
    %v84 = vshrl.u32 %v83, 7
    %v85 = vsub.s32 7, %v84
    %v86 = vrot.slane %v53, %v85
    %vm95 = vcmask 130048
    %v97 = vsel %vm95, %v29, 0
    %v100 = vsel %vm95, %v30, 0
    %v103 = vsel %vm95, %v31, 0
    %v106 = vsel %vm95, %v32, 0
    %v109 = vsel %vm95, %v33, 0
    %v112 = vsel %vm95, %v34, 0
    %v115 = vsel %vm95, %v35, 0
    %v118 = vsel %vm95, %v36, 0
    %120 = vmatprep.subr.mxu0 0.0
    %121 = vmatpush1.msra.mxu0 0.0
    %122 = vmatprep.subr.mxu0 0.0
    %123 = vmatpush1.msra.mxu0 0.0
    %124 = vmatprep.subr.mxu0 0.0
    %125 = vmatpush1.msra.mxu0 0.0
    %126 = vmatprep.subr.mxu0 0.0
    %127 = vmatpush1.msra.mxu0 0.0
    %128 = vmatprep.subr.mxu0 0.0
    %129 = vmatpush1.msra.mxu0 0.0
    %130 = vmatprep.subr.mxu0 0.0
    %131 = vmatpush1.msra.mxu0 0.0
    %132 = vmatprep.subr.mxu0 0.0
    %133 = vmatpush1.msra.mxu0 0.0
    %134 = vmatprep.subr.mxu0 0.0
    %135 = vmatpush1.msra.mxu0 0.0
    %136 = vmatprep.subr.mxu0 0.0
    %137 = vmatpush1.msra.mxu0 0.0
    %138 = vmatprep.subr.mxu0 0.0
    %139 = vmatpush1.msra.mxu0 0.0
    %140 = vmatprep.subr.mxu0 0.0
    %141 = vmatpush1.msra.mxu0 0.0
    %142 = vmatprep.subr.mxu0 0.0
    %143 = vmatpush1.msra.mxu0 0.0
    %144 = vmatprep.subr.mxu0 0.0
    %145 = vmatpush1.msra.mxu0 0.0
    %146 = vmatprep.subr.mxu0 0.0
    %147 = vmatpush1.msra.mxu0 0.0
    %148 = vmatprep.subr.mxu0 %v46
    %149 = vmatpush1.msra.mxu0 %v45
    %150 = vmatprep.subr.mxu0 %v38
    %151 = vmatpush1.msra.mxu0 %v37
    %152 = vmatprep.subr.mxu0 0.0
    %153 = vmatpush2.msra.mxu0 0.0
    %154 = vmatprep.subr.mxu0 0.0
    %155 = vmatpush2.msra.mxu0 0.0
    %156 = vmatprep.subr.mxu0 0.0
    %157 = vmatpush2.msra.mxu0 0.0
    %158 = vmatprep.subr.mxu0 0.0
    %159 = vmatpush2.msra.mxu0 0.0
    %160 = vmatprep.subr.mxu0 0.0
    %161 = vmatpush2.msra.mxu0 0.0
    %162 = vmatprep.subr.mxu0 0.0
    %163 = vmatpush2.msra.mxu0 0.0
    %164 = vmatprep.subr.mxu0 0.0
    %165 = vmatpush2.msra.mxu0 0.0
    %166 = vmatprep.subr.mxu0 0.0
    %167 = vmatpush2.msra.mxu0 0.0
    %168 = vmatprep.subr.mxu0 0.0
    %169 = vmatpush2.msra.mxu0 0.0
    %170 = vmatprep.subr.mxu0 0.0
    %171 = vmatpush2.msra.mxu0 0.0
    %172 = vmatprep.subr.mxu0 0.0
    %173 = vmatpush2.msra.mxu0 0.0
    %174 = vmatprep.subr.mxu0 0.0
    %175 = vmatpush2.msra.mxu0 0.0
    %176 = vmatprep.subr.mxu0 0.0
    %177 = vmatpush2.msra.mxu0 0.0
    %178 = vmatprep.subr.mxu0 0.0
    %179 = vmatpush2.msra.mxu0 0.0
    %180 = vmatprep.subr.mxu0 0.0
    %181 = vmatpush2.msra.mxu0 0.0
    %182 = vmatprep.subr.mxu0 0.0
    %183 = vmatpush2.msra.mxu0 0.0
    %184 = vmatprep.mubr.f32.mxu0 0.0
    %185 = vmatmul.mubr.f32.gmra.mxu0 %v97
    %v186 = vpop.f32.mrf.mxu0
    %v187 = vadd.f32 %v58, %v186
    %v188 = vpop.f32.mrf.mxu0
    %v189 = vadd.f32 %v62, %v188
    %190 = vmatprep.mubr.f32.mxu0 0.0
    %191 = vmatmul.mubr.f32.gmra.mxu0 %v100
    %v192 = vpop.f32.mrf.mxu0
    %v193 = vadd.f32 %v58, %v192
    %v194 = vpop.f32.mrf.mxu0
    %v195 = vadd.f32 %v62, %v194
    %196 = vmatprep.mubr.f32.mxu0 0.0
    %197 = vmatmul.mubr.f32.gmra.mxu0 %v103
    %v198 = vpop.f32.mrf.mxu0
    %v199 = vadd.f32 %v58, %v198
    %v200 = vpop.f32.mrf.mxu0
    %v201 = vadd.f32 %v62, %v200
    %202 = vmatprep.mubr.f32.mxu0 0.0
    %203 = vmatmul.mubr.f32.gmra.mxu0 %v106
    %v204 = vpop.f32.mrf.mxu0
    %v205 = vadd.f32 %v58, %v204
    %v206 = vpop.f32.mrf.mxu0
    %v207 = vadd.f32 %v62, %v206
    %208 = vmatprep.mubr.f32.mxu0 0.0
    %209 = vmatmul.mubr.f32.gmra.mxu0 %v109
    %v210 = vpop.f32.mrf.mxu0
    %v211 = vadd.f32 %v58, %v210
    %v212 = vpop.f32.mrf.mxu0
    %v213 = vadd.f32 %v62, %v212
    %214 = vmatprep.mubr.f32.mxu0 0.0
    %215 = vmatmul.mubr.f32.gmra.mxu0 %v112
    %v216 = vpop.f32.mrf.mxu0
    %v217 = vadd.f32 %v58, %v216
    %v218 = vpop.f32.mrf.mxu0
    %v219 = vadd.f32 %v62, %v218
    %220 = vmatprep.mubr.f32.mxu0 0.0
    %221 = vmatmul.mubr.f32.gmra.mxu0 %v115
    %v222 = vpop.f32.mrf.mxu0
    %v223 = vadd.f32 %v58, %v222
    %v224 = vpop.f32.mrf.mxu0
    %v225 = vadd.f32 %v62, %v224
    %226 = vmatprep.mubr.f32.mxu0 0.0
    %227 = vmatmul.mubr.f32.gmra.mxu0 %v118
    %v228 = vpop.f32.mrf.mxu0
    %v229 = vadd.f32 %v58, %v228
    %v230 = vpop.f32.mrf.mxu0
    %v231 = vadd.f32 %v62, %v230
    %232 = vdwg.mxu0
    %233 = vmatprep.subr.mxu0 0.0
    %234 = vmatpush1.msra.mxu0 0.0
    %235 = vmatprep.subr.mxu0 0.0
    %236 = vmatpush1.msra.mxu0 0.0
    %237 = vmatprep.subr.mxu0 0.0
    %238 = vmatpush1.msra.mxu0 0.0
    %239 = vmatprep.subr.mxu0 0.0
    %240 = vmatpush1.msra.mxu0 0.0
    %241 = vmatprep.subr.mxu0 0.0
    %242 = vmatpush1.msra.mxu0 0.0
    %243 = vmatprep.subr.mxu0 0.0
    %244 = vmatpush1.msra.mxu0 0.0
    %245 = vmatprep.subr.mxu0 0.0
    %246 = vmatpush1.msra.mxu0 0.0
    %247 = vmatprep.subr.mxu0 0.0
    %248 = vmatpush1.msra.mxu0 0.0
    %249 = vmatprep.subr.mxu0 0.0
    %250 = vmatpush1.msra.mxu0 0.0
    %251 = vmatprep.subr.mxu0 0.0
    %252 = vmatpush1.msra.mxu0 0.0
    %253 = vmatprep.subr.mxu0 0.0
    %254 = vmatpush1.msra.mxu0 0.0
    %255 = vmatprep.subr.mxu0 0.0
    %256 = vmatpush1.msra.mxu0 0.0
    %257 = vmatprep.subr.mxu0 0.0
    %258 = vmatpush1.msra.mxu0 0.0
    %259 = vmatprep.subr.mxu0 0.0
    %260 = vmatpush1.msra.mxu0 0.0
    %261 = vmatprep.subr.mxu0 %v48
    %262 = vmatpush1.msra.mxu0 %v47
    %263 = vmatprep.subr.mxu0 %v40
    %264 = vmatpush1.msra.mxu0 %v39
    %265 = vmatprep.subr.mxu0 0.0
    %266 = vmatpush2.msra.mxu0 0.0
    %267 = vmatprep.subr.mxu0 0.0
    %268 = vmatpush2.msra.mxu0 0.0
    %269 = vmatprep.subr.mxu0 0.0
    %270 = vmatpush2.msra.mxu0 0.0
    %271 = vmatprep.subr.mxu0 0.0
    %272 = vmatpush2.msra.mxu0 0.0
    %273 = vmatprep.subr.mxu0 0.0
    %274 = vmatpush2.msra.mxu0 0.0
    %275 = vmatprep.subr.mxu0 0.0
    %276 = vmatpush2.msra.mxu0 0.0
    %277 = vmatprep.subr.mxu0 0.0
    %278 = vmatpush2.msra.mxu0 0.0
    %279 = vmatprep.subr.mxu0 0.0
    %280 = vmatpush2.msra.mxu0 0.0
    %281 = vmatprep.subr.mxu0 0.0
    %282 = vmatpush2.msra.mxu0 0.0
    %283 = vmatprep.subr.mxu0 0.0
    %284 = vmatpush2.msra.mxu0 0.0
    %285 = vmatprep.subr.mxu0 0.0
    %286 = vmatpush2.msra.mxu0 0.0
    %287 = vmatprep.subr.mxu0 0.0
    %288 = vmatpush2.msra.mxu0 0.0
    %289 = vmatprep.subr.mxu0 0.0
    %290 = vmatpush2.msra.mxu0 0.0
    %291 = vmatprep.subr.mxu0 0.0
    %292 = vmatpush2.msra.mxu0 0.0
    %293 = vmatprep.subr.mxu0 0.0
    %294 = vmatpush2.msra.mxu0 0.0
    %295 = vmatprep.subr.mxu0 0.0
    %296 = vmatpush2.msra.mxu0 0.0
    %297 = vmatprep.mubr.f32.mxu0 0.0
    %298 = vmatmul.mubr.f32.gmra.mxu0 %v97
    %v299 = vpop.f32.mrf.mxu0
    %v300 = vadd.f32 %v66, %v299
    %v301 = vpop.f32.mrf.mxu0
    %v302 = vadd.f32 %v70, %v301
    %303 = vmatprep.mubr.f32.mxu0 0.0
    %304 = vmatmul.mubr.f32.gmra.mxu0 %v100
    %v305 = vpop.f32.mrf.mxu0
    %v306 = vadd.f32 %v66, %v305
    %v307 = vpop.f32.mrf.mxu0
    %v308 = vadd.f32 %v70, %v307
    %309 = vmatprep.mubr.f32.mxu0 0.0
    %310 = vmatmul.mubr.f32.gmra.mxu0 %v103
    %v311 = vpop.f32.mrf.mxu0
    %v312 = vadd.f32 %v66, %v311
    %v313 = vpop.f32.mrf.mxu0
    %v314 = vadd.f32 %v70, %v313
    %315 = vmatprep.mubr.f32.mxu0 0.0
    %316 = vmatmul.mubr.f32.gmra.mxu0 %v106
    %v317 = vpop.f32.mrf.mxu0
    %v318 = vadd.f32 %v66, %v317
    %v319 = vpop.f32.mrf.mxu0
    %v320 = vadd.f32 %v70, %v319
    %321 = vmatprep.mubr.f32.mxu0 0.0
    %322 = vmatmul.mubr.f32.gmra.mxu0 %v109
    %v323 = vpop.f32.mrf.mxu0
    %v324 = vadd.f32 %v66, %v323
    %v325 = vpop.f32.mrf.mxu0
    %v326 = vadd.f32 %v70, %v325
    %327 = vmatprep.mubr.f32.mxu0 0.0
    %328 = vmatmul.mubr.f32.gmra.mxu0 %v112
    %v329 = vpop.f32.mrf.mxu0
    %v330 = vadd.f32 %v66, %v329
    %v331 = vpop.f32.mrf.mxu0
    %v332 = vadd.f32 %v70, %v331
    %333 = vmatprep.mubr.f32.mxu0 0.0
    %334 = vmatmul.mubr.f32.gmra.mxu0 %v115
    %v335 = vpop.f32.mrf.mxu0
    %v336 = vadd.f32 %v66, %v335
    %v337 = vpop.f32.mrf.mxu0
    %v338 = vadd.f32 %v70, %v337
    %339 = vmatprep.mubr.f32.mxu0 0.0
    %340 = vmatmul.mubr.f32.gmra.mxu0 %v118
    %v341 = vpop.f32.mrf.mxu0
    %v342 = vadd.f32 %v66, %v341
    %v343 = vpop.f32.mrf.mxu0
    %v344 = vadd.f32 %v70, %v343
    %345 = vdwg.mxu0
    %346 = vmatprep.subr.mxu0 0.0
    %347 = vmatpush1.msra.mxu0 0.0
    %348 = vmatprep.subr.mxu0 0.0
    %349 = vmatpush1.msra.mxu0 0.0
    %350 = vmatprep.subr.mxu0 0.0
    %351 = vmatpush1.msra.mxu0 0.0
    %352 = vmatprep.subr.mxu0 0.0
    %353 = vmatpush1.msra.mxu0 0.0
    %354 = vmatprep.subr.mxu0 0.0
    %355 = vmatpush1.msra.mxu0 0.0
    %356 = vmatprep.subr.mxu0 0.0
    %357 = vmatpush1.msra.mxu0 0.0
    %358 = vmatprep.subr.mxu0 0.0
    %359 = vmatpush1.msra.mxu0 0.0
    %360 = vmatprep.subr.mxu0 0.0
    %361 = vmatpush1.msra.mxu0 0.0
    %362 = vmatprep.subr.mxu0 0.0
    %363 = vmatpush1.msra.mxu0 0.0
    %364 = vmatprep.subr.mxu0 0.0
    %365 = vmatpush1.msra.mxu0 0.0
    %366 = vmatprep.subr.mxu0 0.0
    %367 = vmatpush1.msra.mxu0 0.0
    %368 = vmatprep.subr.mxu0 0.0
    %369 = vmatpush1.msra.mxu0 0.0
    %370 = vmatprep.subr.mxu0 0.0
    %371 = vmatpush1.msra.mxu0 0.0
    %372 = vmatprep.subr.mxu0 0.0
    %373 = vmatpush1.msra.mxu0 0.0
    %374 = vmatprep.subr.mxu0 %v50
    %375 = vmatpush1.msra.mxu0 %v49
    %376 = vmatprep.subr.mxu0 %v42
    %377 = vmatpush1.msra.mxu0 %v41
    %378 = vmatprep.subr.mxu0 0.0
    %379 = vmatpush2.msra.mxu0 0.0
    %380 = vmatprep.subr.mxu0 0.0
    %381 = vmatpush2.msra.mxu0 0.0
    %382 = vmatprep.subr.mxu0 0.0
    %383 = vmatpush2.msra.mxu0 0.0
    %384 = vmatprep.subr.mxu0 0.0
    %385 = vmatpush2.msra.mxu0 0.0
    %386 = vmatprep.subr.mxu0 0.0
    %387 = vmatpush2.msra.mxu0 0.0
    %388 = vmatprep.subr.mxu0 0.0
    %389 = vmatpush2.msra.mxu0 0.0
    %390 = vmatprep.subr.mxu0 0.0
    %391 = vmatpush2.msra.mxu0 0.0
    %392 = vmatprep.subr.mxu0 0.0
    %393 = vmatpush2.msra.mxu0 0.0
    %394 = vmatprep.subr.mxu0 0.0
    %395 = vmatpush2.msra.mxu0 0.0
    %396 = vmatprep.subr.mxu0 0.0
    %397 = vmatpush2.msra.mxu0 0.0
    %398 = vmatprep.subr.mxu0 0.0
    %399 = vmatpush2.msra.mxu0 0.0
    %400 = vmatprep.subr.mxu0 0.0
    %401 = vmatpush2.msra.mxu0 0.0
    %402 = vmatprep.subr.mxu0 0.0
    %403 = vmatpush2.msra.mxu0 0.0
    %404 = vmatprep.subr.mxu0 0.0
    %405 = vmatpush2.msra.mxu0 0.0
    %406 = vmatprep.subr.mxu0 0.0
    %407 = vmatpush2.msra.mxu0 0.0
    %408 = vmatprep.subr.mxu0 0.0
    %409 = vmatpush2.msra.mxu0 0.0
    %410 = vmatprep.mubr.f32.mxu0 0.0
    %411 = vmatmul.mubr.f32.gmra.mxu0 %v97
    %v412 = vpop.f32.mrf.mxu0
    %v413 = vadd.f32 %v74, %v412
    %v414 = vpop.f32.mrf.mxu0
    %v415 = vadd.f32 %v78, %v414
    %416 = vmatprep.mubr.f32.mxu0 0.0
    %417 = vmatmul.mubr.f32.gmra.mxu0 %v100
    %v418 = vpop.f32.mrf.mxu0
    %v419 = vadd.f32 %v74, %v418
    %v420 = vpop.f32.mrf.mxu0
    %v421 = vadd.f32 %v78, %v420
    %422 = vmatprep.mubr.f32.mxu0 0.0
    %423 = vmatmul.mubr.f32.gmra.mxu0 %v103
    %v424 = vpop.f32.mrf.mxu0
    %v425 = vadd.f32 %v74, %v424
    %v426 = vpop.f32.mrf.mxu0
    %v427 = vadd.f32 %v78, %v426
    %428 = vmatprep.mubr.f32.mxu0 0.0
    %429 = vmatmul.mubr.f32.gmra.mxu0 %v106
    %v430 = vpop.f32.mrf.mxu0
    %v431 = vadd.f32 %v74, %v430
    %v432 = vpop.f32.mrf.mxu0
    %v433 = vadd.f32 %v78, %v432
    %434 = vmatprep.mubr.f32.mxu0 0.0
    %435 = vmatmul.mubr.f32.gmra.mxu0 %v109
    %v436 = vpop.f32.mrf.mxu0
    %v437 = vadd.f32 %v74, %v436
    %v438 = vpop.f32.mrf.mxu0
    %v439 = vadd.f32 %v78, %v438
    %440 = vmatprep.mubr.f32.mxu0 0.0
    %441 = vmatmul.mubr.f32.gmra.mxu0 %v112
    %v442 = vpop.f32.mrf.mxu0
    %v443 = vadd.f32 %v74, %v442
    %v444 = vpop.f32.mrf.mxu0
    %v445 = vadd.f32 %v78, %v444
    %446 = vmatprep.mubr.f32.mxu0 0.0
    %447 = vmatmul.mubr.f32.gmra.mxu0 %v115
    %v448 = vpop.f32.mrf.mxu0
    %v449 = vadd.f32 %v74, %v448
    %v450 = vpop.f32.mrf.mxu0
    %v451 = vadd.f32 %v78, %v450
    %452 = vmatprep.mubr.f32.mxu0 0.0
    %453 = vmatmul.mubr.f32.gmra.mxu0 %v118
    %v454 = vpop.f32.mrf.mxu0
    %v455 = vadd.f32 %v74, %v454
    %v456 = vpop.f32.mrf.mxu0
    %v457 = vadd.f32 %v78, %v456
    %458 = vdwg.mxu0
    %459 = vmatprep.subr.mxu0 0.0
    %460 = vmatpush1.msra.mxu0 0.0
    %461 = vmatprep.subr.mxu0 0.0
    %462 = vmatpush1.msra.mxu0 0.0
    %463 = vmatprep.subr.mxu0 0.0
    %464 = vmatpush1.msra.mxu0 0.0
    %465 = vmatprep.subr.mxu0 0.0
    %466 = vmatpush1.msra.mxu0 0.0
    %467 = vmatprep.subr.mxu0 0.0
    %468 = vmatpush1.msra.mxu0 0.0
    %469 = vmatprep.subr.mxu0 0.0
    %470 = vmatpush1.msra.mxu0 0.0
    %471 = vmatprep.subr.mxu0 0.0
    %472 = vmatpush1.msra.mxu0 0.0
    %473 = vmatprep.subr.mxu0 0.0
    %474 = vmatpush1.msra.mxu0 0.0
    %475 = vmatprep.subr.mxu0 0.0
    %476 = vmatpush1.msra.mxu0 0.0
    %477 = vmatprep.subr.mxu0 0.0
    %478 = vmatpush1.msra.mxu0 0.0
    %479 = vmatprep.subr.mxu0 0.0
    %480 = vmatpush1.msra.mxu0 0.0
    %481 = vmatprep.subr.mxu0 0.0
    %482 = vmatpush1.msra.mxu0 0.0
    %483 = vmatprep.subr.mxu0 0.0
    %484 = vmatpush1.msra.mxu0 0.0
    %485 = vmatprep.subr.mxu0 0.0
    %486 = vmatpush1.msra.mxu0 0.0
    %487 = vmatprep.subr.mxu0 %v52
    %488 = vmatpush1.msra.mxu0 %v51
    %489 = vmatprep.subr.mxu0 %v44
    %490 = vmatpush1.msra.mxu0 %v43
    %491 = vmatprep.subr.mxu0 0.0
    %492 = vmatpush2.msra.mxu0 0.0
    %493 = vmatprep.subr.mxu0 0.0
    %494 = vmatpush2.msra.mxu0 0.0
    %495 = vmatprep.subr.mxu0 0.0
    %496 = vmatpush2.msra.mxu0 0.0
    %497 = vmatprep.subr.mxu0 0.0
    %498 = vmatpush2.msra.mxu0 0.0
    %499 = vmatprep.subr.mxu0 0.0
    %500 = vmatpush2.msra.mxu0 0.0
    %501 = vmatprep.subr.mxu0 0.0
    %502 = vmatpush2.msra.mxu0 0.0
    %503 = vmatprep.subr.mxu0 0.0
    %504 = vmatpush2.msra.mxu0 0.0
    %505 = vmatprep.subr.mxu0 0.0
    %506 = vmatpush2.msra.mxu0 0.0
    %507 = vmatprep.subr.mxu0 0.0
    %508 = vmatpush2.msra.mxu0 0.0
    %509 = vmatprep.subr.mxu0 0.0
    %510 = vmatpush2.msra.mxu0 0.0
    %511 = vmatprep.subr.mxu0 0.0
    %512 = vmatpush2.msra.mxu0 0.0
    %513 = vmatprep.subr.mxu0 0.0
    %514 = vmatpush2.msra.mxu0 0.0
    %515 = vmatprep.subr.mxu0 0.0
    %516 = vmatpush2.msra.mxu0 0.0
    %517 = vmatprep.subr.mxu0 0.0
    %518 = vmatpush2.msra.mxu0 0.0
    %519 = vmatprep.subr.mxu0 0.0
    %520 = vmatpush2.msra.mxu0 0.0
    %521 = vmatprep.subr.mxu0 0.0
    %522 = vmatpush2.msra.mxu0 0.0
    %523 = vmatprep.mubr.f32.mxu0 0.0
    %524 = vmatmul.mubr.f32.gmra.mxu0 %v97
    %v525 = vpop.f32.mrf.mxu0
    %v526 = vadd.f32 %v82, %v525
    %v527 = vpop.f32.mrf.mxu0
    %v528 = vadd.f32 %v86, %v527
    %529 = vmatprep.mubr.f32.mxu0 0.0
    %530 = vmatmul.mubr.f32.gmra.mxu0 %v100
    %v531 = vpop.f32.mrf.mxu0
    %v532 = vadd.f32 %v82, %v531
    %v533 = vpop.f32.mrf.mxu0
    %v534 = vadd.f32 %v86, %v533
    %535 = vmatprep.mubr.f32.mxu0 0.0
    %536 = vmatmul.mubr.f32.gmra.mxu0 %v103
    %v537 = vpop.f32.mrf.mxu0
    %v538 = vadd.f32 %v82, %v537
    %v539 = vpop.f32.mrf.mxu0
    %v540 = vadd.f32 %v86, %v539
    %541 = vmatprep.mubr.f32.mxu0 0.0
    %542 = vmatmul.mubr.f32.gmra.mxu0 %v106
    %v543 = vpop.f32.mrf.mxu0
    %v544 = vadd.f32 %v82, %v543
    %v545 = vpop.f32.mrf.mxu0
    %v546 = vadd.f32 %v86, %v545
    %547 = vmatprep.mubr.f32.mxu0 0.0
    %548 = vmatmul.mubr.f32.gmra.mxu0 %v109
    %v549 = vpop.f32.mrf.mxu0
    %v550 = vadd.f32 %v82, %v549
    %v551 = vpop.f32.mrf.mxu0
    %v552 = vadd.f32 %v86, %v551
    %553 = vmatprep.mubr.f32.mxu0 0.0
    %554 = vmatmul.mubr.f32.gmra.mxu0 %v112
    %v555 = vpop.f32.mrf.mxu0
    %v556 = vadd.f32 %v82, %v555
    %v557 = vpop.f32.mrf.mxu0
    %v558 = vadd.f32 %v86, %v557
    %559 = vmatprep.mubr.f32.mxu0 0.0
    %560 = vmatmul.mubr.f32.gmra.mxu0 %v115
    %v561 = vpop.f32.mrf.mxu0
    %v562 = vadd.f32 %v82, %v561
    %v563 = vpop.f32.mrf.mxu0
    %v564 = vadd.f32 %v86, %v563
    %565 = vmatprep.mubr.f32.mxu0 0.0
    %566 = vmatmul.mubr.f32.gmra.mxu0 %v118
    %v567 = vpop.f32.mrf.mxu0
    %v568 = vadd.f32 %v82, %v567
    %v569 = vpop.f32.mrf.mxu0
    %v570 = vadd.f32 %v86, %v569
    %571 = vdwg.mxu0
    %572 = vst [vmem:[#allocation5] sm:$0xff] %v187
    %573 = vst [vmem:[#allocation5 + $0x8] sm:$0xff] %v189
    %574 = vst [vmem:[#allocation5 + $0x10] sm:$0xff] %v300
    %575 = vst [vmem:[#allocation5 + $0x18] sm:$0xff] %v302
    %576 = vst [vmem:[#allocation5 + $0x20] sm:$0xff] %v413
    %577 = vst [vmem:[#allocation5 + $0x28] sm:$0xff] %v415
    %578 = vst [vmem:[#allocation5 + $0x30] sm:$0xff] %v526
    %579 = vst [vmem:[#allocation5 + $0x38] sm:$0xff] %v528
    %580 = vst [vmem:[#allocation5 + $0x40] sm:$0xff] %v193
    %581 = vst [vmem:[#allocation5 + $0x48] sm:$0xff] %v195
    %582 = vst [vmem:[#allocation5 + $0x50] sm:$0xff] %v306
    %583 = vst [vmem:[#allocation5 + $0x58] sm:$0xff] %v308
    %584 = vst [vmem:[#allocation5 + $0x60] sm:$0xff] %v419
    %585 = vst [vmem:[#allocation5 + $0x68] sm:$0xff] %v421
    %586 = vst [vmem:[#allocation5 + $0x70] sm:$0xff] %v532
    %587 = vst [vmem:[#allocation5 + $0x78] sm:$0xff] %v534
    %588 = vst [vmem:[#allocation5 + $0x80] sm:$0xff] %v199
    %589 = vst [vmem:[#allocation5 + $0x88] sm:$0xff] %v201
    %590 = vst [vmem:[#allocation5 + $0x90] sm:$0xff] %v312
    %591 = vst [vmem:[#allocation5 + $0x98] sm:$0xff] %v314
    %592 = vst [vmem:[#allocation5 + $0xa0] sm:$0xff] %v425
    %593 = vst [vmem:[#allocation5 + $0xa8] sm:$0xff] %v427
    %594 = vst [vmem:[#allocation5 + $0xb0] sm:$0xff] %v538
    %595 = vst [vmem:[#allocation5 + $0xb8] sm:$0xff] %v540
    %596 = vst [vmem:[#allocation5 + $0xc0] sm:$0xff] %v205
    %597 = vst [vmem:[#allocation5 + $0xc8] sm:$0xff] %v207
    %598 = vst [vmem:[#allocation5 + $0xd0] sm:$0xff] %v318
    %599 = vst [vmem:[#allocation5 + $0xd8] sm:$0xff] %v320
    %600 = vst [vmem:[#allocation5 + $0xe0] sm:$0xff] %v431
    %601 = vst [vmem:[#allocation5 + $0xe8] sm:$0xff] %v433
    %602 = vst [vmem:[#allocation5 + $0xf0] sm:$0xff] %v544
    %603 = vst [vmem:[#allocation5 + $0xf8] sm:$0xff] %v546
    %604 = vst [vmem:[#allocation5 + $0x100] sm:$0xff] %v211
    %605 = vst [vmem:[#allocation5 + $0x108] sm:$0xff] %v213
    %606 = vst [vmem:[#allocation5 + $0x110] sm:$0xff] %v324
    %607 = vst [vmem:[#allocation5 + $0x118] sm:$0xff] %v326
    %608 = vst [vmem:[#allocation5 + $0x120] sm:$0xff] %v437
    %609 = vst [vmem:[#allocation5 + $0x128] sm:$0xff] %v439
    %610 = vst [vmem:[#allocation5 + $0x130] sm:$0xff] %v550
    %611 = vst [vmem:[#allocation5 + $0x138] sm:$0xff] %v552
    %612 = vst [vmem:[#allocation5 + $0x140] sm:$0xff] %v217
    %613 = vst [vmem:[#allocation5 + $0x148] sm:$0xff] %v219
    %614 = vst [vmem:[#allocation5 + $0x150] sm:$0xff] %v330
    %615 = vst [vmem:[#allocation5 + $0x158] sm:$0xff] %v332
    %616 = vst [vmem:[#allocation5 + $0x160] sm:$0xff] %v443
    %617 = vst [vmem:[#allocation5 + $0x168] sm:$0xff] %v445
    %618 = vst [vmem:[#allocation5 + $0x170] sm:$0xff] %v556
    %619 = vst [vmem:[#allocation5 + $0x178] sm:$0xff] %v558
    %620 = vst [vmem:[#allocation5 + $0x180] sm:$0xff] %v223
    %621 = vst [vmem:[#allocation5 + $0x188] sm:$0xff] %v225
    %622 = vst [vmem:[#allocation5 + $0x190] sm:$0xff] %v336
    %623 = vst [vmem:[#allocation5 + $0x198] sm:$0xff] %v338
    %624 = vst [vmem:[#allocation5 + $0x1a0] sm:$0xff] %v449
    %625 = vst [vmem:[#allocation5 + $0x1a8] sm:$0xff] %v451
    %626 = vst [vmem:[#allocation5 + $0x1b0] sm:$0xff] %v562
    %627 = vst [vmem:[#allocation5 + $0x1b8] sm:$0xff] %v564
    %628 = vst [vmem:[#allocation5 + $0x1c0] sm:$0xff] %v229
    %629 = vst [vmem:[#allocation5 + $0x1c8] sm:$0xff] %v231
    %630 = vst [vmem:[#allocation5 + $0x1d0] sm:$0xff] %v342
    %631 = vst [vmem:[#allocation5 + $0x1d8] sm:$0xff] %v344
    %632 = vst [vmem:[#allocation5 + $0x1e0] sm:$0xff] %v455
    %633 = vst [vmem:[#allocation5 + $0x1e8] sm:$0xff] %v457
    %634 = vst [vmem:[#allocation5 + $0x1f0] sm:$0xff] %v568
    %635 = vst [vmem:[#allocation5 + $0x1f8] sm:$0xff] %v570
    // Predicated region
    $region18: #{tpu_custom_call.1} parent=1 // pred_check
      _
    $region19: #{tpu_custom_call.1} parent=1 // pred_check_branch
      %637 = sbr.rel (0) target = $region21
    $region20: #{tpu_custom_call.1} parent=1 // pred_region
      %s639 = ssub.s32 8192, 8192
      %640 = vsyncadd [#allocation4], %s639
      %s641 = sshll.u32 [#allocation5], 4
      %s642 = int_to_ptr.vmem [resolvable:$true] %s641
      %647 = dma.vmem_to_hbm [thread:$0]  %s642, 8192, %s3, [#allocation4], 1024, 1024, 64
    $region21: #{tpu_custom_call.1} parent=1 // pred_fallthru
      _
    // Predicated region
    $region22: #{tpu_custom_call.1} parent=1 // pred_check
      _
    $region23: #{tpu_custom_call.1} parent=1 // pred_check_branch
      %649 = sbr.rel (0) target = $region25
    $region24: #{tpu_custom_call.1} parent=1 // pred_region
      %650 = dma.done [#allocation4], 8192
    $region25: #{tpu_custom_call.1} parent=1 // pred_fallthru
      _
    %651 = vsyncpa [#allocation3], 1
    %652 = vsyncpa [#allocation4], 1

</llo_original>
